<compile_context>
chip_gen: v7x
topology: tpu7x:2x2x1
jax: 0.10.0
libtpu: 0.0.40
codegen_flags: <defaults>
</compile_context>

<pallas_src>
import math
import functools

import jax
import jax.numpy as jnp
from jax import lax
from jax.experimental import pallas as pl
from jax.experimental.pallas import tpu as pltpu


# --------------------------------------------------------------------------
# helpers
# --------------------------------------------------------------------------
def _pick_tile(total, preferred):
    """Largest multiple of 128 <= preferred that divides `total` (lane/row tiles)."""
    if total % 128 != 0 or total <= 128:
        return total
    t = min(preferred, total)
    t -= t % 128
    while total % t != 0:
        t -= 128
    return max(t, 128)


def _embed_tail(gem, we, be, gamma, beta):
    """Linear + BatchNorm1d(training: batch stats, biased var) + ReLU."""
    lin = jnp.dot(gem, we, preferred_element_type=jnp.float32) + be
    mu = jnp.mean(lin, axis=0, keepdims=True)
    var = jnp.mean((lin - mu) * (lin - mu), axis=0, keepdims=True)
    bn = gamma * (lin - mu) * lax.rsqrt(var + 1e-5) + beta
    return jnp.maximum(bn, 0.0)


# --------------------------------------------------------------------------
# Kernel A: backbone stand-in (1x1 conv + ReLU) fused with GeM pooling
# --------------------------------------------------------------------------
def _proj_gem_kernel(x_ref, w_ref, b_ref, p_ref, o_ref, acc_ref, *, hw_total):
    gem_eps = 1e-6
    j = pl.program_id(1)
    p = p_ref[0, 0]

    @pl.when(j == 0)
    def _():
        acc_ref[...] = jnp.zeros_like(acc_ref)

    x2d = x_ref[0]                                        # (Cin, TILE_HW), NCHW layout
    # in-register contraction over the tiny Cin axis (no host transpose),
    # bf16 operands on the MXU with f32 accumulation.
    y = lax.dot_general(
        x2d.astype(jnp.bfloat16), w_ref[...].astype(jnp.bfloat16),
        dimension_numbers=(((0,), (0,)), ((), ())),
        preferred_element_type=jnp.float32)               # (TILE_HW, Cf)
    y = y + b_ref[...]
    x_cl = jnp.maximum(y, gem_eps)                        # ReLU fused with clamp(min=eps)
    x_p = jnp.exp(p * jnp.log(x_cl))                      # x ** p  (x > 0)
    acc_ref[...] += jnp.sum(x_p, axis=0, keepdims=True)   # partial sum over this HW tile

    @pl.when(j == pl.num_programs(1) - 1)
    def _():
        pooled = acc_ref[...] / float(hw_total)           # avg pool (divide only once)
        gem = jnp.exp(jnp.log(pooled) / p)                # pooled ** (1/p)
        o_ref[...] = gem[None, :, :]                      # (1, 1, Cf)


def backbone_gem_pool(image_nchw, w, b, p, *, tile_hw_pref=512):
    B, Cin, H, W = image_nchw.shape
    Cf = w.shape[1]
    HW = H * W
    x = image_nchw.reshape(B, Cin, HW)                    # free reshape, no transpose
    tile_hw = _pick_tile(HW, tile_hw_pref)
    n_hw = HW // tile_hw

    kernel = functools.partial(_proj_gem_kernel, hw_total=HW)
    out = pl.pallas_call(
        kernel,
        out_shape=jax.ShapeDtypeStruct((B, 1, Cf), jnp.float32),
        grid=(B, n_hw),
        in_specs=[
            pl.BlockSpec((1, Cin, tile_hw), lambda bi, j: (bi, 0, j)),
            pl.BlockSpec((Cin, Cf), lambda bi, j: (0, 0)),
            pl.BlockSpec((1, Cf), lambda bi, j: (0, 0)),
            pl.BlockSpec((1, 1), lambda bi, j: (0, 0)),
        ],
        out_specs=pl.BlockSpec((1, 1, Cf), lambda bi, j: (bi, 0, 0)),
        scratch_shapes=[pltpu.VMEM((1, Cf), jnp.float32)],
        compiler_params=pltpu.CompilerParams(
            dimension_semantics=("parallel", "arbitrary")),
    )(x, w, b, p)
    return out.reshape(B, Cf)


# --------------------------------------------------------------------------
# Kernel B: embedding tail (Linear + BN + ReLU) fused with ArcMarginProduct,
#           tiled over the class axis
# --------------------------------------------------------------------------
def _embed_arcface_kernel(pooled_ref, we_ref, be_ref, g_ref, bta_ref,
                          w_ref, label_ref, out_ref, emb_ref, xn_ref,
                          *, s, cos_m, sin_m, th, mm, tile_n):
    j = pl.program_id(0)

    @pl.when(j == 0)
    def _():
        emb = _embed_tail(pooled_ref[...], we_ref[...], be_ref[...],
                          g_ref[...], bta_ref[...])
        emb_ref[...] = emb
        nrm = jnp.maximum(jnp.sqrt(jnp.sum(emb * emb, axis=-1, keepdims=True)), 1e-12)
        xn_ref[...] = emb / nrm                           # F.normalize(input)

    w = w_ref[...]                                        # (TILE_N, E)
    wn = w / jnp.maximum(jnp.sqrt(jnp.sum(w * w, axis=-1, keepdims=True)), 1e-12)

    # contract last dims -> no in-kernel weight transpose
    cosine = lax.dot_general(xn_ref[...], wn,
                             dimension_numbers=(((1,), (1,)), ((), ())),
                             preferred_element_type=jnp.float32)   # (B, TILE_N)
    sine = jnp.sqrt(jnp.maximum(1.0 - cosine * cosine, 0.0))       # clamped vs NaN
    phi = cosine * cos_m - sine * sin_m
    phi = jnp.where(cosine > th, phi, cosine - mm)                 # easy_margin=False

    B, TN = cosine.shape
    cls_ids = lax.broadcasted_iota(jnp.int32, (B, TN), 1) + j * tile_n
    one_hot = (cls_ids == label_ref[...]).astype(jnp.float32)      # scatter_ -> one-hot
    # ls_eps == 0.0 -> no label smoothing
    out_ref[...] = (one_hot * phi + (1.0 - one_hot) * cosine) * s


def embed_arcface(pooled, we, be, gamma, beta, arc_w, labels,
                  *, s=30.0, m=0.5, tile_n_pref=512):
    B, Cf = pooled.shape
    E = we.shape[1]
    N = arc_w.shape[0]
    tile_n = _pick_tile(N, tile_n_pref)
    n_tiles = N // tile_n
    labels2d = labels.reshape(B, 1).astype(jnp.int32)

    kernel = functools.partial(
        _embed_arcface_kernel,
        s=s, cos_m=math.cos(m), sin_m=math.sin(m),
        th=math.cos(math.pi - m), mm=math.sin(math.pi - m) * m,
        tile_n=tile_n)

    out, emb = pl.pallas_call(
        kernel,
        out_shape=(jax.ShapeDtypeStruct((B, N), jnp.float32),
                   jax.ShapeDtypeStruct((B, E), jnp.float32)),
        grid=(n_tiles,),
        in_specs=[
            pl.BlockSpec((B, Cf), lambda j: (0, 0)),
            pl.BlockSpec((Cf, E), lambda j: (0, 0)),
            pl.BlockSpec((1, E), lambda j: (0, 0)),
            pl.BlockSpec((1, E), lambda j: (0, 0)),
            pl.BlockSpec((1, E), lambda j: (0, 0)),
            pl.BlockSpec((tile_n, E), lambda j: (j, 0)),   # stream classes through VMEM
            pl.BlockSpec((B, 1), lambda j: (0, 0)),
        ],
        out_specs=(pl.BlockSpec((B, tile_n), lambda j: (0, j)),
                   pl.BlockSpec((B, E), lambda j: (0, 0))),
        scratch_shapes=[pltpu.VMEM((B, E), jnp.float32)],  # normalized embedding
        # "arbitrary": steps j>0 depend on the j==0 scratch init
        compiler_params=pltpu.CompilerParams(dimension_semantics=("arbitrary",)),
    )(pooled, we, be, gamma, beta, arc_w, labels2d)
    return out, emb


# --------------------------------------------------------------------------
# Inference path (target is None): embedding tail only (tiny, single block)
# --------------------------------------------------------------------------
def _embed_only_kernel(pooled_ref, we_ref, be_ref, g_ref, bta_ref, emb_ref):
    emb_ref[...] = _embed_tail(pooled_ref[...], we_ref[...], be_ref[...],
                               g_ref[...], bta_ref[...])


def embed_only(pooled, we, be, gamma, beta):
    B, Cf = pooled.shape
    E = we.shape[1]
    return pl.pallas_call(
        _embed_only_kernel,
        out_shape=jax.ShapeDtypeStruct((B, E), jnp.float32),
        in_specs=[pl.BlockSpec((B, Cf), lambda: (0, 0)),
                  pl.BlockSpec((Cf, E), lambda: (0, 0)),
                  pl.BlockSpec((1, E), lambda: (0, 0)),
                  pl.BlockSpec((1, E), lambda: (0, 0)),
                  pl.BlockSpec((1, E), lambda: (0, 0))],
        out_specs=pl.BlockSpec((B, E), lambda: (0, 0)),
    )(pooled, we, be, gamma, beta)


# --------------------------------------------------------------------------
# Full model forward
# --------------------------------------------------------------------------
def happywhale_forward(image, target, params):
    pooled = backbone_gem_pool(image, params["wb"], params["bb"], params["gem_p"])
    if target is None:
        return embed_only(pooled, params["we"], params["be"],
                          params["bn_g"], params["bn_b"])
    out, emb = embed_arcface(pooled, params["we"], params["be"],
                             params["bn_g"], params["bn_b"],
                             params["arc_w"], target, s=30.0, m=0.5)
    return out, emb


def init_params(key, Cin, Cf, E, N):
    ks = jax.random.split(key, 5)
    wb = 0.1 * jax.random.normal(ks[0], (Cin, Cf), jnp.float32)
    bb = jnp.zeros((1, Cf), jnp.float32)
    gem_p = jnp.full((1, 1), 3.0, jnp.float32)
    bound = 1.0 / math.sqrt(Cf)
    we = jax.random.uniform(ks[1], (Cf, E), jnp.float32, -bound, bound)
    be = jax.random.uniform(ks[2], (1, E), jnp.float32, -bound, bound)
    bn_g = jnp.ones((1, E), jnp.float32)
    bn_b = jnp.zeros((1, E), jnp.float32)
    a = math.sqrt(6.0 / (E + N))                          # xavier_uniform_
    arc_w = jax.random.uniform(ks[3], (N, E), jnp.float32, -a, a)
    return {"wb": wb, "bb": bb, "gem_p": gem_p, "we": we, "be": be,
            "bn_g": bn_g, "bn_b": bn_b, "arc_w": arc_w}


# --------------------------------------------------------------------------
# pure-JAX reference (mirrors the kernel math, incl. bf16 backbone matmul)
# --------------------------------------------------------------------------
def reference_forward(image, target, params, s=30.0, m=0.5):
    B, Cin, H, W = image.shape
    x = image.reshape(B, Cin, H * W)
    y = jnp.einsum("bct,cf->btf",
                   x.astype(jnp.bfloat16), params["wb"].astype(jnp.bfloat16),
                   preferred_element_type=jnp.float32) + params["bb"]
    p = params["gem_p"][0, 0]
    xc = jnp.maximum(y, 1e-6)
    pooled = jnp.mean(xc ** p, axis=1)
    gem = pooled ** (1.0 / p)
    lin = gem @ params["we"] + params["be"]
    mu = jnp.mean(lin, axis=0, keepdims=True)
    var = jnp.mean((lin - mu) ** 2, axis=0, keepdims=True)
    emb = jnp.maximum(params["bn_g"] * (lin - mu) * lax.rsqrt(var + 1e-5)
                      + params["bn_b"], 0.0)
    xn = emb / jnp.maximum(jnp.linalg.norm(emb, axis=-1, keepdims=True), 1e-12)
    wn = params["arc_w"] / jnp.maximum(
        jnp.linalg.norm(params["arc_w"], axis=-1, keepdims=True), 1e-12)
    cosine = xn @ wn.T
    sine = jnp.sqrt(jnp.maximum(1.0 - cosine * cosine, 0.0))
    phi = cosine * math.cos(m) - sine * math.sin(m)
    phi = jnp.where(cosine > math.cos(math.pi - m), phi,
                    cosine - math.sin(math.pi - m) * m)
    one_hot = jax.nn.one_hot(target, cosine.shape[1], dtype=jnp.float32)
    out = (one_hot * phi + (1.0 - one_hot) * cosine) * s
    return out, emb


if __name__ == "__main__":
    # small shapes, but chosen so tiling / accumulation paths are exercised:
    # HW = 1024 -> 2 HW tiles of 512; N = 1024 -> 2 class tiles of 512.
    B, Cin, H, W = 2, 4, 32, 32        # NCHW image
    Cf = 128                            # backbone_features (lane-aligned)
    E = 128                             # embeddingSize
    N = 1024                            # numClasses

    key = jax.random.PRNGKey(0)
    k_param, k_img, k_lab = jax.random.split(key, 3)

    params = init_params(k_param, Cin, Cf, E, N)
    image = jax.random.normal(k_img, (B, Cin, H, W), jnp.float32)
    target = jax.random.randint(k_lab, (B,), 0, N, jnp.int32)

    out, emb = happywhale_forward(image, target, params)     # training path
    emb_infer = happywhale_forward(image, None, params)      # inference path
    jax.block_until_ready((out, emb, emb_infer))

    assert out.shape == (B, N) and emb.shape == (B, E) and emb_infer.shape == (B, E)
    assert bool(jnp.all(jnp.isfinite(out))) and bool(jnp.all(jnp.isfinite(emb)))

    ref_out, ref_emb = reference_forward(image, target, params)
    assert bool(jnp.allclose(emb, ref_emb, rtol=5e-3, atol=5e-3))
    assert bool(jnp.allclose(emb_infer, ref_emb, rtol=5e-3, atol=5e-3))
    assert bool(jnp.allclose(out, ref_out, rtol=5e-3, atol=5e-2))

    print("KERNEL_OK")
</pallas_src>

<mosaic_0001>
module attributes {stable_mosaic.version = 11 : i64} {
  func.func @_proj_gem_kernel(%arg0: i32, %arg1: i32, %arg2: memref<1x4x512xf32, #tpu.memory_space<vmem>>, %arg3: memref<4x128xf32, #tpu.memory_space<vmem>>, %arg4: memref<1x128xf32, #tpu.memory_space<vmem>>, %arg5: memref<1x1xf32, #tpu.memory_space<vmem>>, %arg6: memref<1x1x128xf32, #tpu.memory_space<vmem>>, %arg7: memref<1x128xf32, #tpu.memory_space<vmem>>) attributes {dimension_semantics = [#tpu.dimension_semantics<parallel>, #tpu.dimension_semantics<arbitrary>], iteration_bounds = array<i64: 2, 2>, scalar_prefetch = 0 : i64, scratch_operands = 1 : i64, tpu.core_type = #tpu.core_type<tc>, window_params = [{transform_indices = @transform_0, window_bounds = array<i64: 1, 4, 512>}, {pipeline_mode = #tpu.pipeline_mode<synchronous>, transform_indices = @transform_1, window_bounds = array<i64: 4, 128>}, {pipeline_mode = #tpu.pipeline_mode<synchronous>, transform_indices = @transform_2, window_bounds = array<i64: 1, 128>}, {pipeline_mode = #tpu.pipeline_mode<synchronous>, transform_indices = @transform_3, window_bounds = array<i64: 1, 1>}, {transform_indices = @transform_4, window_bounds = array<i64: 1, 1, 128>}]} {
    %c0 = arith.constant 0 : index
    %c0_0 = arith.constant 0 : index
    %0 = vector.load %arg5[%c0, %c0_0] : memref<1x1xf32, #tpu.memory_space<vmem>>, vector<1x1xf32>
    %1 = vector.extract %0[0, 0] : f32 from vector<1x1xf32>
    %c0_i32 = arith.constant 0 : i32
    %2 = arith.cmpi eq, %arg1, %c0_i32 : i32
    %3 = arith.extui %2 : i1 to i32
    %c0_i32_1 = arith.constant 0 : i32
    %4 = arith.cmpi ne, %3, %c0_i32_1 : i32
    scf.if %4 {
      %cst_16 = arith.constant 0.000000e+00 : f32
      %28 = vector.broadcast %cst_16 : f32 to vector<1x128xf32>
      %c0_17 = arith.constant 0 : index
      %c0_18 = arith.constant 0 : index
      %29 = vector.load %arg7[%c0_17, %c0_18] : memref<1x128xf32, #tpu.memory_space<vmem>>, vector<1x128xf32>
      tpu.vector_store %arg7[%c0_17, %c0_18], %28 {strides = array<i32>} : memref<1x128xf32, #tpu.memory_space<vmem>>, vector<1x128xf32>,
    } else {
    }
    %c0_2 = arith.constant 0 : index
    %c0_3 = arith.constant 0 : index
    %c0_4 = arith.constant 0 : index
    %5 = vector.load %arg2[%c0_2, %c0_3, %c0_4] : memref<1x4x512xf32, #tpu.memory_space<vmem>>, vector<1x4x512xf32>
    %6 = vector.shape_cast %5 : vector<1x4x512xf32> to vector<4x512xf32>
    %7 = arith.truncf %6 : vector<4x512xf32> to vector<4x512xbf16>
    %c0_5 = arith.constant 0 : index
    %c0_6 = arith.constant 0 : index
    %8 = vector.load %arg3[%c0_5, %c0_6] : memref<4x128xf32, #tpu.memory_space<vmem>>, vector<4x128xf32>
    %9 = arith.truncf %8 : vector<4x128xf32> to vector<4x128xbf16>
    %cst = arith.constant dense<0.000000e+00> : vector<512x128xf32>
    %10 = tpu.matmul %7, %9, %cst {dimension_numbers = #tpu.dot_dimension_numbers<[0], [0], [1], [1], [0, 1, 1, 1], [], []>} : vector<4x512xbf16>, vector<4x128xbf16>, vector<512x128xf32> -> vector<512x128xf32>
    %c0_7 = arith.constant 0 : index
    %c0_8 = arith.constant 0 : index
    %11 = vector.load %arg4[%c0_7, %c0_8] : memref<1x128xf32, #tpu.memory_space<vmem>>, vector<1x128xf32>
    %12 = vector.broadcast %11 : vector<1x128xf32> to vector<512x128xf32>
    %13 = arith.addf %10, %12 : vector<512x128xf32>
    %cst_9 = arith.constant 9.99999997E-7 : f32
    %14 = vector.broadcast %cst_9 : f32 to vector<512x128xf32>
    %15 = arith.maximumf %13, %14 : vector<512x128xf32>
    %16 = math.log %15 : vector<512x128xf32>
    %17 = vector.broadcast %1 : f32 to vector<512x128xf32>
    %18 = arith.mulf %17, %16 : vector<512x128xf32>
    %19 = math.exp %18 : vector<512x128xf32>
    %c0_10 = arith.constant 0 : index
    %c0_11 = arith.constant 0 : index
    %20 = vector.load %arg7[%c0_10, %c0_11] : memref<1x128xf32, #tpu.memory_space<vmem>>, vector<1x128xf32>
    %cst_12 = arith.constant dense<0.000000e+00> : vector<128xf32>
    %21 = vector.multi_reduction <add>, %19, %cst_12 [0] : vector<512x128xf32> to vector<128xf32>
    %22 = vector.shape_cast %21 : vector<128xf32> to vector<1x128xf32>
    %23 = arith.addf %20, %22 : vector<1x128xf32>
    %c0_13 = arith.constant 0 : index
    %c0_14 = arith.constant 0 : index
    %24 = vector.load %arg7[%c0_13, %c0_14] : memref<1x128xf32, #tpu.memory_space<vmem>>, vector<1x128xf32>
    tpu.vector_store %arg7[%c0_13, %c0_14], %23 {strides = array<i32>} : memref<1x128xf32, #tpu.memory_space<vmem>>, vector<1x128xf32>,
    %c1_i32 = arith.constant 1 : i32
    %25 = arith.cmpi eq, %arg1, %c1_i32 : i32
    %26 = arith.extui %25 : i1 to i32
    %c0_i32_15 = arith.constant 0 : i32
    %27 = arith.cmpi ne, %26, %c0_i32_15 : i32
    scf.if %27 {
      %c0_16 = arith.constant 0 : index
      %c0_17 = arith.constant 0 : index
      %28 = vector.load %arg7[%c0_16, %c0_17] : memref<1x128xf32, #tpu.memory_space<vmem>>, vector<1x128xf32>
      %cst_18 = arith.constant 1.024000e+03 : f32
      %29 = vector.broadcast %cst_18 : f32 to vector<1x128xf32>
      %30 = arith.divf %28, %29 : vector<1x128xf32>
      %31 = math.log %30 : vector<1x128xf32>
      %32 = vector.broadcast %1 : f32 to vector<1x128xf32>
      %33 = arith.divf %31, %32 : vector<1x128xf32>
      %34 = math.exp %33 : vector<1x128xf32>
      %35 = vector.shape_cast %34 : vector<1x128xf32> to vector<1x1x128xf32>
      %c0_19 = arith.constant 0 : index
      %c0_20 = arith.constant 0 : index
      %c0_21 = arith.constant 0 : index
      %36 = vector.load %arg6[%c0_19, %c0_20, %c0_21] : memref<1x1x128xf32, #tpu.memory_space<vmem>>, vector<1x1x128xf32>
      tpu.vector_store %arg6[%c0_19, %c0_20, %c0_21], %35 {strides = array<i32>} : memref<1x1x128xf32, #tpu.memory_space<vmem>>, vector<1x1x128xf32>,
    } else {
    }
    return
  }
  func.func @transform_0(%arg0: i32, %arg1: i32) -> (i32, i32, i32) {
    %c0_i32 = arith.constant 0 : i32
    %c0_i32_0 = arith.constant 0 : i32
    return %arg0, %c0_i32, %arg1 : i32, i32, i32
  }
  func.func @transform_1(%arg0: i32, %arg1: i32) -> (i32, i32) {
    %c0_i32 = arith.constant 0 : i32
    %c0_i32_0 = arith.constant 0 : i32
    %c0_i32_1 = arith.constant 0 : i32
    return %c0_i32, %c0_i32_0 : i32, i32
  }
  func.func @transform_2(%arg0: i32, %arg1: i32) -> (i32, i32) {
    %c0_i32 = arith.constant 0 : i32
    %c0_i32_0 = arith.constant 0 : i32
    %c0_i32_1 = arith.constant 0 : i32
    return %c0_i32, %c0_i32_0 : i32, i32
  }
  func.func @transform_3(%arg0: i32, %arg1: i32) -> (i32, i32) {
    %c0_i32 = arith.constant 0 : i32
    %c0_i32_0 = arith.constant 0 : i32
    %c0_i32_1 = arith.constant 0 : i32
    return %c0_i32, %c0_i32_0 : i32, i32
  }
  func.func @transform_4(%arg0: i32, %arg1: i32) -> (i32, i32, i32) {
    %c0_i32 = arith.constant 0 : i32
    %c0_i32_0 = arith.constant 0 : i32
    %c0_i32_1 = arith.constant 0 : i32
    return %arg0, %c0_i32, %c0_i32_0 : i32, i32, i32
  }
}

</mosaic_0001>

<llo_original>
// kernel: tpu_custom_call.1
$region0: #{tpu_custom_call.1}
  #allocation0 [shape = 'u32[]', space=smem, size = 0x4, offset = 0x4, fixed_abs, tag = 'smem constant byte address 0x4 - core index']
  #allocation1 [shape = 'u32[144,128]{1,0:T(1,128)}', space=vmem, size = 0x12000, scoped, tag = 'internal scratch']
  #allocation2 [shape = 'f32[1,128]{1,0:T(1,128)}', space=vmem, size = 0x200, scoped, tag = 'scratch operand']
  #allocation3 [shape = 'f32[1,1]{1,0:T(1,128)S(1)}', space=vmem, size = 0x200, scoped, tag = 'scoped memory for tpu_custom_call.1']
  %s0 = inlined_call_operand.hbm [shape: f32[2,4,1024], index: 0, kind: input, shape index: {}]
  %s1 = inlined_call_operand.vmem [shape: f32[4,128], index: 1, kind: input, shape index: {}]
  %s2 = inlined_call_operand.vmem [shape: f32[1,128], index: 2, kind: input, shape index: {}]
  %s3 = inlined_call_operand.<no memory space> [shape: f32[1,1], index: 3, kind: input, shape index: {}]
  %s4 = inlined_call_operand.hbm [shape: f32[2,1,128], index: 4, kind: output, shape index: {}]
  %s5 = sld [smem:[#allocation0]]
  $region61: #{tpu_custom_call.1} parent=0
    _
  %s7 = ssub.s32 1, %s5
  %s8 = scalar_select 0, %s7, %s5
  %v9 = vstv %s3
  %10 = vst [vmem:[#allocation3] sm:$0x1] %v9
  $region1: #{tpu_custom_call.1} parent=0
    #allocation4 [shape = 'u8[16384]{0}', space=vmem, size = 0x4000, scoped, tag = 'input window, operand 0']
    #allocation5 [shape = 's32[2]{0}', space=sflag, size = 0x8, scoped, tag = 'scoped memory for tpu_custom_call.1']
    #allocation6 [shape = 's32[2]{0}', space=sflag, size = 0x8, scoped, tag = 'scoped memory for tpu_custom_call.1']
    #allocation7 [shape = 'u8[1024]{0}', space=vmem, size = 0x400, scoped, tag = 'output window, operand 0']
    %11 = vsyncpa [#allocation5], 0
    %s12 = scalar_lea.sflag [#allocation5], 1
    %13 = vsyncpa %s12, 0
    %14 = vsyncpa [#allocation6], 0
    %s15 = scalar_lea.sflag [#allocation6], 1
    %16 = vsyncpa %s15, 0
    loop: start=0, step=1, limit=6
    $region2: #{tpu_custom_call.1} parent=1 // loop_pre_header
      _
    $region3: #{tpu_custom_call.1} parent=1 // loop_header
      %s18 = sphi 0, %s22
      %p19 = scmp.ge.s32.totalorder %s18, 6
      %s25 = sphi 0, %s37
      %s26 = sphi 0, %s33
      %s27 = sphi 0, %s25
      %s28 = sphi 0, %s26
      %s29 = sphi 0, %s27
      %s30 = sphi 0, %s28
      %s42 = sphi 0, %s44
      %s45 = sphi 0, %s42
      %s46 = sphi 0, %s45
      %s62 = sphi 0, %s46
      %s66 = sphi 0, %s66
      %s68 = sphi 0, %s66
      %s69 = sphi 0, %s68
      %s83 = sphi 0, %s69
      %s87 = sphi 0, %s87
      %s89 = sphi 0, %s87
      %s90 = sphi 0, %s89
      %s104 = sphi 0, %s90
      %s108 = sphi 0, %s108
      %s110 = sphi 0, %s108
      %s111 = sphi 0, %s110
      %s125 = sphi 0, %s111
      %s131 = sphi 0, %s133
      %s134 = sphi 0, %s131
      %s135 = sphi 0, %s134
      %s151 = sphi 0, %s135
    $region4: #{tpu_custom_call.1} parent=1 // loop_header_branch
      %21 = sbr.rel (%p19) target = $region8
    $region5: #{tpu_custom_call.1} parent=1 // loop_body
      %s23 = ssub.s32 %s18, 1
      %s24 = ssub.s32 %s18, 2
      %s31 = sadd.s32 1, %s26
      %p32 = scmp.ge.s32.totalorder %s31, 2
      %s33 = scalar_select %p32, 0, %s31
      %s34 = sadd.s32 1, %s25
      %s35 = scalar_select %p32, %s34, %s25
      %p36 = scmp.ge.s32.totalorder %s35, 2
      %s37 = scalar_select %p36, 0, %s35
      %s38 = ssub.s32 %s25, %s37
      %s39 = ssub.s32 %s26, %s33
      %s40 = sor.u32 %s38, %s39
      %p41 = scmp.eq.s32.totalorder %s40, 0
      %s43 = sadd.s32 %s42, 1
      %s44 = scalar_select %p41, %s42, %s43
      %p47 = pneg %p41
      %p48 = scmp.eq.s32.totalorder %s18, 3
      %p49 = por %p47, %p48
      %p50 = scmp.ne.s32.totalorder %s42, %s45
      %p51 = scmp.eq.s32.totalorder %s18, 0
      %p52 = por %p50, %p51
      %p53 = scmp.ne.s32.totalorder %s42, %s45
      %p54 = scmp.eq.s32.totalorder %s23, 3
      %p55 = por %p53, %p54
      %p56 = scmp.ne.s32.totalorder %s45, %s46
      %p57 = scmp.eq.s32.totalorder %s23, 0
      %p58 = por %p56, %p57
      %p59 = scmp.ne.s32.totalorder %s45, %s46
      %p60 = scmp.eq.s32.totalorder %s24, 3
      %p61 = por %p59, %p60
      %p63 = scmp.ne.s32.totalorder %s46, %s62
      %p64 = scmp.eq.s32.totalorder %s24, 0
      %p65 = por %p63, %p64
      %s67 = sadd.s32 %s66, 1
      %p70 = scmp.eq.s32.totalorder %s18, 3
      %p71 = scmp.ne.s32.totalorder %s66, %s68
      %p72 = scmp.eq.s32.totalorder %s18, 0
      %p73 = por %p71, %p72
      %p74 = scmp.ne.s32.totalorder %s66, %s68
      %p75 = scmp.eq.s32.totalorder %s23, 3
      %p76 = por %p74, %p75
      %p77 = scmp.ne.s32.totalorder %s68, %s69
      %p78 = scmp.eq.s32.totalorder %s23, 0
      %p79 = por %p77, %p78
      %p80 = scmp.ne.s32.totalorder %s68, %s69
      %p81 = scmp.eq.s32.totalorder %s24, 3
      %p82 = por %p80, %p81
      %p84 = scmp.ne.s32.totalorder %s69, %s83
      %p85 = scmp.eq.s32.totalorder %s24, 0
      %p86 = por %p84, %p85
      %s88 = sadd.s32 %s87, 1
      %p91 = scmp.eq.s32.totalorder %s18, 3
      %p92 = scmp.ne.s32.totalorder %s87, %s89
      %p93 = scmp.eq.s32.totalorder %s18, 0
      %p94 = por %p92, %p93
      %p95 = scmp.ne.s32.totalorder %s87, %s89
      %p96 = scmp.eq.s32.totalorder %s23, 3
      %p97 = por %p95, %p96
      %p98 = scmp.ne.s32.totalorder %s89, %s90
      %p99 = scmp.eq.s32.totalorder %s23, 0
      %p100 = por %p98, %p99
      %p101 = scmp.ne.s32.totalorder %s89, %s90
      %p102 = scmp.eq.s32.totalorder %s24, 3
      %p103 = por %p101, %p102
      %p105 = scmp.ne.s32.totalorder %s90, %s104
      %p106 = scmp.eq.s32.totalorder %s24, 0
      %p107 = por %p105, %p106
      %s109 = sadd.s32 %s108, 1
      %p112 = scmp.eq.s32.totalorder %s18, 3
      %p113 = scmp.ne.s32.totalorder %s108, %s110
      %p114 = scmp.eq.s32.totalorder %s18, 0
      %p115 = por %p113, %p114
      %p116 = scmp.ne.s32.totalorder %s108, %s110
      %p117 = scmp.eq.s32.totalorder %s23, 3
      %p118 = por %p116, %p117
      %p119 = scmp.ne.s32.totalorder %s110, %s111
      %p120 = scmp.eq.s32.totalorder %s23, 0
      %p121 = por %p119, %p120
      %p122 = scmp.ne.s32.totalorder %s110, %s111
      %p123 = scmp.eq.s32.totalorder %s24, 3
      %p124 = por %p122, %p123
      %p126 = scmp.ne.s32.totalorder %s111, %s125
      %p127 = scmp.eq.s32.totalorder %s24, 0
      %p128 = por %p126, %p127
      %s129 = ssub.s32 %s25, %s37
      %p130 = scmp.eq.s32.totalorder %s129, 0
      %s132 = sadd.s32 %s131, 1
      %s133 = scalar_select %p130, %s131, %s132
      %p136 = pneg %p130
      %p137 = scmp.eq.s32.totalorder %s18, 3
      %p138 = por %p136, %p137
      %p139 = scmp.ne.s32.totalorder %s131, %s134
      %p140 = scmp.eq.s32.totalorder %s18, 0
      %p141 = por %p139, %p140
      %p142 = scmp.ne.s32.totalorder %s131, %s134
      %p143 = scmp.eq.s32.totalorder %s23, 3
      %p144 = por %p142, %p143
      %p145 = scmp.ne.s32.totalorder %s134, %s135
      %p146 = scmp.eq.s32.totalorder %s23, 0
      %p147 = por %p145, %p146
      %p148 = scmp.ne.s32.totalorder %s134, %s135
      %p149 = scmp.eq.s32.totalorder %s24, 3
      %p150 = por %p148, %p149
      %p152 = scmp.ne.s32.totalorder %s135, %s151
      %p153 = scmp.eq.s32.totalorder %s24, 0
      %p154 = por %p152, %p153
      %p155 = scmp.le.s32.totalorder 1, %s18
      %p156 = scmp.lt.s32.totalorder %s18, 5
      %p157 = pnand %p155, %p156
      %p158 = pneg %p157
      // Predicated region
      $region9: #{tpu_custom_call.1} parent=5 // pred_check
        _
      $region10: #{tpu_custom_call.1} parent=5 // pred_check_branch
        %160 = sbr.rel (%p157) target = $region12
      $region11: #{tpu_custom_call.1} parent=5 // pred_region
        %s161 = ssub.s32 %s18, 1
        // Predicated region
        $region13: #{tpu_custom_call.1} parent=11 // pred_check
          %p162 = pneg %p79
        $region14: #{tpu_custom_call.1} parent=11 // pred_check_branch
          %164 = sbr.rel (%p162) target = $region16
        $region15: #{tpu_custom_call.1} parent=11 // pred_region
          _
        $region16: #{tpu_custom_call.1} parent=11 // pred_fallthru
          _
        // Predicated region
        $region17: #{tpu_custom_call.1} parent=11 // pred_check
          %p165 = pneg %p100
        $region18: #{tpu_custom_call.1} parent=11 // pred_check_branch
          %167 = sbr.rel (%p165) target = $region20
        $region19: #{tpu_custom_call.1} parent=11 // pred_region
          _
        $region20: #{tpu_custom_call.1} parent=11 // pred_fallthru
          _
        // Predicated region
        $region21: #{tpu_custom_call.1} parent=11 // pred_check
          %p168 = pneg %p121
        $region22: #{tpu_custom_call.1} parent=11 // pred_check_branch
          %170 = sbr.rel (%p168) target = $region24
        $region23: #{tpu_custom_call.1} parent=11 // pred_region
          _
        $region24: #{tpu_custom_call.1} parent=11 // pred_fallthru
          _
      $region12: #{tpu_custom_call.1} parent=5 // pred_fallthru
        _
      %p171 = scmp.lt.s32.totalorder %s18, 4
      // Predicated region
      $region25: #{tpu_custom_call.1} parent=5 // pred_check
        %p172 = pneg %p171
      $region26: #{tpu_custom_call.1} parent=5 // pred_check_branch
        %174 = sbr.rel (%p172) target = $region28
      $region27: #{tpu_custom_call.1} parent=5 // pred_region
        // Predicated region
        $region29: #{tpu_custom_call.1} parent=27 // pred_check
          %p175 = pneg %p52
        $region30: #{tpu_custom_call.1} parent=27 // pred_check_branch
          %177 = sbr.rel (%p175) target = $region32
        $region31: #{tpu_custom_call.1} parent=27 // pred_region
          %s178 = sand.u32 %s42, 1
          %s179 = scalar_lea.sflag [#allocation5], %s178
          %s180 = sand.u32 %s42, 1
          %s181 = smul.addr %s180, 16
          %s182 = scalar_lea.vmem [#allocation4], %s181
          %s183 = smul.u32 4, %s26
          %s185 = ssub.s32 256, 256
          %186 = vsyncadd %s179, %s185
          %s187 = smul.addr %s25, 8
          %s188 = sadd.s32 %s183, %s187
          %s189 = smul.addr %s188, 64
          %s190 = scalar_lea.hbm %s0, %s189
          %s192 = sshll.u32 %s182, 4
          %s193 = int_to_ptr.vmem [resolvable:$true] %s192
          %195 = dma.hbm_to_vmem [thread:$0]  %s190, 256, %s193, %s179
        $region32: #{tpu_custom_call.1} parent=27 // pred_fallthru
          _
      $region28: #{tpu_custom_call.1} parent=5 // pred_fallthru
        _
      %p196 = scmp.le.s32.totalorder 1, %s18
      %p197 = scmp.lt.s32.totalorder %s18, 5
      %p198 = pnand %p196, %p197
      %p199 = pneg %p198
      // Predicated region
      $region33: #{tpu_custom_call.1} parent=5 // pred_check
        _
      $region34: #{tpu_custom_call.1} parent=5 // pred_check_branch
        %201 = sbr.rel (%p198) target = $region36
      $region35: #{tpu_custom_call.1} parent=5 // pred_region
        %s202 = ssub.s32 %s18, 1
        %s203 = sand.u32 %s45, 1
        %s204 = scalar_lea.sflag [#allocation5], %s203
        %s205 = sand.u32 %s45, 1
        %s206 = smul.addr %s205, 16
        %s207 = scalar_lea.vmem [#allocation4], %s206
        // Predicated region
        $region37: #{tpu_custom_call.1} parent=35 // pred_check
          %p208 = pneg %p58
        $region38: #{tpu_custom_call.1} parent=35 // pred_check_branch
          %210 = sbr.rel (%p208) target = $region40
        $region39: #{tpu_custom_call.1} parent=35 // pred_region
          %211 = dma.done %s204, 256
        $region40: #{tpu_custom_call.1} parent=35 // pred_fallthru
          _
        %s212 = sand.u32 %s45, 1
        %s213 = scalar_lea.sflag [#allocation5], %s212
        %s214 = sand.u32 %s45, 1
        %s215 = smul.addr %s214, 16
        %s216 = scalar_lea.vmem [#allocation4], %s215
        %p217 = pneg %p58
        %p218 = pneg %p55
        %p219 = pneg %p79
        %p220 = pneg %p76
        %p221 = pneg %p100
        %p222 = pneg %p97
        %p223 = pneg %p121
        %p224 = pneg %p118
        %p225 = pneg %p147
        %p226 = pneg %p144
        %s227 = sand.u32 %s134, 1
        %s228 = scalar_lea.sflag [#allocation6], %s227
        %s229 = sand.u32 %s134, 1
        %s230 = scalar_lea.vmem [#allocation7], %s229
        %s231 = smul.u32 4, %s28
        %v233 = vld [vmem:[#allocation3] sm:$0x1]
        %s234 = vtos %v233
        %p235 = scmp.eq.s32.totalorder %s28, 0
        // Predicated region
        $region41: #{tpu_custom_call.1} parent=35 // pred_check
          %p236 = pneg %p235
        $region42: #{tpu_custom_call.1} parent=35 // pred_check_branch
          %238 = sbr.rel (%p236) target = $region44
        $region43: #{tpu_custom_call.1} parent=35 // pred_region
          %239 = vst [vmem:[#allocation2] sm:$0x1] 0.0
        $region44: #{tpu_custom_call.1} parent=35 // pred_fallthru
          _
        %v240 = vld [vmem:[%s207] sm:$0xff]
        %v241 = vld [vmem:[%s207 + $0x8] sm:$0xff]
        %v244 = vcombine.high %v240, %v240
        %v245 = vcombine.high %v241, %v241
        %v248 = vpack.c.bf16 %v240, %v240
        %v249 = vpack.c.bf16 %v244, %v244
        %v250 = vpack.c.bf16 %v241, %v241
        %v251 = vpack.c.bf16 %v245, %v245
        %v252 = vld [vmem:[%s1] sm:$0xf]
        %v253 = vpack.c.bf16 %v252, %v252
        %v254 = vld [vmem:[%s2] sm:$0x1]
        %v256 = vlaneseq
        %v257 = vshrl.u32 %v256, 7
        %v258 = vsub.s32 0, %v257
        %v259 = vrot.slane %v254, %v258
        %261 = vxpose.xlu0.c.b16.start [1/8] %v248, 128
        %262 = vxpose.xlu0.c.b16.cont [2/8] 0, 128
        %263 = vxpose.xlu0.c.b16.cont [3/8] 0, 128
        %264 = vxpose.xlu0.c.b16.cont [4/8] 0, 128
        %265 = vxpose.xlu0.c.b16.cont [5/8] 0, 128
        %266 = vxpose.xlu0.c.b16.cont [6/8] 0, 128
        %267 = vxpose.xlu0.c.b16.cont [7/8] 0, 128
        %268 = vxpose.xlu0.c.b16.end [8/8] 0, 128
        %v269 = vpop.trf.xlu0
        %v270 = vpop.trf.xlu0
        %v271 = vpop.trf.xlu0
        %v272 = vpop.trf.xlu0
        %v273 = vpop.trf.xlu0
        %v274 = vpop.trf.xlu0
        %v275 = vpop.trf.xlu0
        %v276 = vpop.trf.xlu0
        %277 = vxpose.xlu0.c.b16.start [1/8] %v249, 128
        %278 = vxpose.xlu0.c.b16.cont [2/8] 0, 128
        %279 = vxpose.xlu0.c.b16.cont [3/8] 0, 128
        %280 = vxpose.xlu0.c.b16.cont [4/8] 0, 128
        %281 = vxpose.xlu0.c.b16.cont [5/8] 0, 128
        %282 = vxpose.xlu0.c.b16.cont [6/8] 0, 128
        %283 = vxpose.xlu0.c.b16.cont [7/8] 0, 128
        %284 = vxpose.xlu0.c.b16.end [8/8] 0, 128
        %v285 = vpop.trf.xlu0
        %v286 = vpop.trf.xlu0
        %v287 = vpop.trf.xlu0
        %v288 = vpop.trf.xlu0
        %v289 = vpop.trf.xlu0
        %v290 = vpop.trf.xlu0
        %v291 = vpop.trf.xlu0
        %v292 = vpop.trf.xlu0
        %293 = vxpose.xlu0.c.b16.start [1/8] %v250, 128
        %294 = vxpose.xlu0.c.b16.cont [2/8] 0, 128
        %295 = vxpose.xlu0.c.b16.cont [3/8] 0, 128
        %296 = vxpose.xlu0.c.b16.cont [4/8] 0, 128
        %297 = vxpose.xlu0.c.b16.cont [5/8] 0, 128
        %298 = vxpose.xlu0.c.b16.cont [6/8] 0, 128
        %299 = vxpose.xlu0.c.b16.cont [7/8] 0, 128
        %300 = vxpose.xlu0.c.b16.end [8/8] 0, 128
        %v301 = vpop.trf.xlu0
        %v302 = vpop.trf.xlu0
        %v303 = vpop.trf.xlu0
        %v304 = vpop.trf.xlu0
        %v305 = vpop.trf.xlu0
        %v306 = vpop.trf.xlu0
        %v307 = vpop.trf.xlu0
        %v308 = vpop.trf.xlu0
        %309 = vxpose.xlu0.c.b16.start [1/8] %v251, 128
        %310 = vxpose.xlu0.c.b16.cont [2/8] 0, 128
        %311 = vxpose.xlu0.c.b16.cont [3/8] 0, 128
        %312 = vxpose.xlu0.c.b16.cont [4/8] 0, 128
        %313 = vxpose.xlu0.c.b16.cont [5/8] 0, 128
        %314 = vxpose.xlu0.c.b16.cont [6/8] 0, 128
        %315 = vxpose.xlu0.c.b16.cont [7/8] 0, 128
        %316 = vxpose.xlu0.c.b16.end [8/8] 0, 128
        %v317 = vpop.trf.xlu0
        %v318 = vpop.trf.xlu0
        %v319 = vpop.trf.xlu0
        %v320 = vpop.trf.xlu0
        %v321 = vpop.trf.xlu0
        %v322 = vpop.trf.xlu0
        %v323 = vpop.trf.xlu0
        %v324 = vpop.trf.xlu0
        %vm325 = vcmask 31744
        %v327 = vsel %vm325, %v269, 0
        %v330 = vsel %vm325, %v270, 0
        %v333 = vsel %vm325, %v271, 0
        %v336 = vsel %vm325, %v272, 0
        %v339 = vsel %vm325, %v273, 0
        %v342 = vsel %vm325, %v274, 0
        %v345 = vsel %vm325, %v275, 0
        %v348 = vsel %vm325, %v276, 0
        %v351 = vsel %vm325, %v285, 0
        %v354 = vsel %vm325, %v286, 0
        %v357 = vsel %vm325, %v287, 0
        %v360 = vsel %vm325, %v288, 0
        %v363 = vsel %vm325, %v289, 0
        %v366 = vsel %vm325, %v290, 0
        %v369 = vsel %vm325, %v291, 0
        %v372 = vsel %vm325, %v292, 0
        %v375 = vsel %vm325, %v301, 0
        %v378 = vsel %vm325, %v302, 0
        %v381 = vsel %vm325, %v303, 0
        %v384 = vsel %vm325, %v304, 0
        %v387 = vsel %vm325, %v305, 0
        %v390 = vsel %vm325, %v306, 0
        %v393 = vsel %vm325, %v307, 0
        %v396 = vsel %vm325, %v308, 0
        %v399 = vsel %vm325, %v317, 0
        %v402 = vsel %vm325, %v318, 0
        %v405 = vsel %vm325, %v319, 0
        %v408 = vsel %vm325, %v320, 0
        %v411 = vsel %vm325, %v321, 0
        %v414 = vsel %vm325, %v322, 0
        %v417 = vsel %vm325, %v323, 0
        %v420 = vsel %vm325, %v324, 0
        %vm422 = vcmask 1041408
        %v424 = vsel %vm422, %v253, 0
        %426 = vmatprep.subr.bf16.mxu0 0
        %427 = vmatpush1.bf16.msra.mxu0 %v424
        %428 = vmatprep.subr.bf16.mxu0 0
        %429 = vmatpush1.bf16.msra.mxu0 0
        %430 = vmatprep.subr.bf16.mxu0 0
        %431 = vmatpush1.bf16.msra.mxu0 0
        %432 = vmatprep.subr.bf16.mxu0 0
        %433 = vmatpush1.bf16.msra.mxu0 0
        %434 = vmatprep.subr.bf16.mxu0 0
        %435 = vmatpush1.bf16.msra.mxu0 0
        %436 = vmatprep.subr.bf16.mxu0 0
        %437 = vmatpush1.bf16.msra.mxu0 0
        %438 = vmatprep.subr.bf16.mxu0 0
        %439 = vmatpush1.bf16.msra.mxu0 0
        %440 = vmatprep.subr.bf16.mxu0 0
        %441 = vmatpush1.bf16.msra.mxu0 0
        %442 = vmatprep.subr.bf16.mxu0 0
        %443 = vmatpush1.bf16.msra.mxu0 0
        %444 = vmatprep.subr.bf16.mxu0 0
        %445 = vmatpush1.bf16.msra.mxu0 0
        %446 = vmatprep.subr.bf16.mxu0 0
        %447 = vmatpush1.bf16.msra.mxu0 0
        %448 = vmatprep.subr.bf16.mxu0 0
        %449 = vmatpush1.bf16.msra.mxu0 0
        %450 = vmatprep.subr.bf16.mxu0 0
        %451 = vmatpush1.bf16.msra.mxu0 0
        %452 = vmatprep.subr.bf16.mxu0 0
        %453 = vmatpush1.bf16.msra.mxu0 0
        %454 = vmatprep.subr.bf16.mxu0 0
        %455 = vmatpush1.bf16.msra.mxu0 0
        %456 = vmatprep.subr.bf16.mxu0 0
        %457 = vmatpush1.bf16.msra.mxu0 0
        %458 = vmatprep.mubr.bf16.mxu0 0
        %459 = vmatmul.mubr.bf16.gmra.mrb[0].mxu0 %v327
        %v460 = vpop.f32.mrb[0].mxu0
        %v461 = vadd.f32 %v259, %v460
        %v462 = vpop.f32.mrb[0].mxu0
        %v463 = vpop.f32.mrb[0].mxu0
        %v464 = vadd.f32 %v259, %v463
        %v465 = vpop.f32.mrb[0].mxu0
        %466 = vmatprep.mubr.bf16.mxu0 0
        %467 = vmatmul.mubr.bf16.gmra.mrb[0].mxu0 %v330
        %v468 = vpop.f32.mrb[0].mxu0
        %v469 = vadd.f32 %v259, %v468
        %v470 = vpop.f32.mrb[0].mxu0
        %v471 = vpop.f32.mrb[0].mxu0
        %v472 = vadd.f32 %v259, %v471
        %v473 = vpop.f32.mrb[0].mxu0
        %474 = vmatprep.mubr.bf16.mxu0 0
        %475 = vmatmul.mubr.bf16.gmra.mrb[0].mxu0 %v333
        %v476 = vpop.f32.mrb[0].mxu0
        %v477 = vadd.f32 %v259, %v476
        %v478 = vpop.f32.mrb[0].mxu0
        %v479 = vpop.f32.mrb[0].mxu0
        %v480 = vadd.f32 %v259, %v479
        %v481 = vpop.f32.mrb[0].mxu0
        %482 = vmatprep.mubr.bf16.mxu0 0
        %483 = vmatmul.mubr.bf16.gmra.mrb[0].mxu0 %v336
        %v484 = vpop.f32.mrb[0].mxu0
        %v485 = vadd.f32 %v259, %v484
        %v486 = vpop.f32.mrb[0].mxu0
        %v487 = vpop.f32.mrb[0].mxu0
        %v488 = vadd.f32 %v259, %v487
        %v489 = vpop.f32.mrb[0].mxu0
        %490 = vmatprep.mubr.bf16.mxu0 0
        %491 = vmatmul.mubr.bf16.gmra.mrb[0].mxu0 %v339
        %v492 = vpop.f32.mrb[0].mxu0
        %v493 = vadd.f32 %v259, %v492
        %v494 = vpop.f32.mrb[0].mxu0
        %v495 = vpop.f32.mrb[0].mxu0
        %v496 = vadd.f32 %v259, %v495
        %v497 = vpop.f32.mrb[0].mxu0
        %498 = vmatprep.mubr.bf16.mxu0 0
        %499 = vmatmul.mubr.bf16.gmra.mrb[0].mxu0 %v342
        %v500 = vpop.f32.mrb[0].mxu0
        %v501 = vadd.f32 %v259, %v500
        %v502 = vpop.f32.mrb[0].mxu0
        %v503 = vpop.f32.mrb[0].mxu0
        %v504 = vadd.f32 %v259, %v503
        %v505 = vpop.f32.mrb[0].mxu0
        %506 = vmatprep.mubr.bf16.mxu0 0
        %507 = vmatmul.mubr.bf16.gmra.mrb[0].mxu0 %v345
        %v508 = vpop.f32.mrb[0].mxu0
        %v509 = vadd.f32 %v259, %v508
        %v510 = vpop.f32.mrb[0].mxu0
        %v511 = vpop.f32.mrb[0].mxu0
        %v512 = vadd.f32 %v259, %v511
        %v513 = vpop.f32.mrb[0].mxu0
        %514 = vmatprep.mubr.bf16.mxu0 0
        %515 = vmatmul.mubr.bf16.gmra.mrb[0].mxu0 %v348
        %v516 = vpop.f32.mrb[0].mxu0
        %v517 = vadd.f32 %v259, %v516
        %v518 = vpop.f32.mrb[0].mxu0
        %v519 = vpop.f32.mrb[0].mxu0
        %v520 = vadd.f32 %v259, %v519
        %v521 = vpop.f32.mrb[0].mxu0
        %522 = vmatprep.mubr.bf16.mxu0 0
        %523 = vmatmul.mubr.bf16.gmra.mrb[0].mxu0 %v351
        %v524 = vpop.f32.mrb[0].mxu0
        %v525 = vadd.f32 %v259, %v524
        %v526 = vpop.f32.mrb[0].mxu0
        %v527 = vpop.f32.mrb[0].mxu0
        %v528 = vadd.f32 %v259, %v527
        %v529 = vpop.f32.mrb[0].mxu0
        %530 = vmatprep.mubr.bf16.mxu0 0
        %531 = vmatmul.mubr.bf16.gmra.mrb[0].mxu0 %v354
        %v532 = vpop.f32.mrb[0].mxu0
        %v533 = vadd.f32 %v259, %v532
        %v534 = vpop.f32.mrb[0].mxu0
        %v535 = vpop.f32.mrb[0].mxu0
        %v536 = vadd.f32 %v259, %v535
        %v537 = vpop.f32.mrb[0].mxu0
        %538 = vmatprep.mubr.bf16.mxu0 0
        %539 = vmatmul.mubr.bf16.gmra.mrb[0].mxu0 %v357
        %v540 = vpop.f32.mrb[0].mxu0
        %v541 = vadd.f32 %v259, %v540
        %v542 = vpop.f32.mrb[0].mxu0
        %v543 = vpop.f32.mrb[0].mxu0
        %v544 = vadd.f32 %v259, %v543
        %v545 = vpop.f32.mrb[0].mxu0
        %546 = vmatprep.mubr.bf16.mxu0 0
        %547 = vmatmul.mubr.bf16.gmra.mrb[0].mxu0 %v360
        %v548 = vpop.f32.mrb[0].mxu0
        %v549 = vadd.f32 %v259, %v548
        %v550 = vpop.f32.mrb[0].mxu0
        %v551 = vpop.f32.mrb[0].mxu0
        %v552 = vadd.f32 %v259, %v551
        %v553 = vpop.f32.mrb[0].mxu0
        %554 = vmatprep.mubr.bf16.mxu0 0
        %555 = vmatmul.mubr.bf16.gmra.mrb[0].mxu0 %v363
        %v556 = vpop.f32.mrb[0].mxu0
        %v557 = vadd.f32 %v259, %v556
        %v558 = vpop.f32.mrb[0].mxu0
        %v559 = vpop.f32.mrb[0].mxu0
        %v560 = vadd.f32 %v259, %v559
        %v561 = vpop.f32.mrb[0].mxu0
        %562 = vmatprep.mubr.bf16.mxu0 0
        %563 = vmatmul.mubr.bf16.gmra.mrb[0].mxu0 %v366
        %v564 = vpop.f32.mrb[0].mxu0
        %v565 = vadd.f32 %v259, %v564
        %v566 = vpop.f32.mrb[0].mxu0
        %v567 = vpop.f32.mrb[0].mxu0
        %v568 = vadd.f32 %v259, %v567
        %v569 = vpop.f32.mrb[0].mxu0
        %570 = vmatprep.mubr.bf16.mxu0 0
        %571 = vmatmul.mubr.bf16.gmra.mrb[0].mxu0 %v369
        %v572 = vpop.f32.mrb[0].mxu0
        %v573 = vadd.f32 %v259, %v572
        %v574 = vpop.f32.mrb[0].mxu0
        %v575 = vpop.f32.mrb[0].mxu0
        %v576 = vadd.f32 %v259, %v575
        %v577 = vpop.f32.mrb[0].mxu0
        %578 = vmatprep.mubr.bf16.mxu0 0
        %579 = vmatmul.mubr.bf16.gmra.mrb[0].mxu0 %v372
        %v580 = vpop.f32.mrb[0].mxu0
        %v581 = vadd.f32 %v259, %v580
        %v582 = vpop.f32.mrb[0].mxu0
        %v583 = vpop.f32.mrb[0].mxu0
        %v584 = vadd.f32 %v259, %v583
        %v585 = vpop.f32.mrb[0].mxu0
        %586 = vmatprep.mubr.bf16.mxu0 0
        %587 = vmatmul.mubr.bf16.gmra.mrb[0].mxu0 %v375
        %v588 = vpop.f32.mrb[0].mxu0
        %v589 = vadd.f32 %v259, %v588
        %v590 = vpop.f32.mrb[0].mxu0
        %v591 = vpop.f32.mrb[0].mxu0
        %v592 = vadd.f32 %v259, %v591
        %v593 = vpop.f32.mrb[0].mxu0
        %594 = vmatprep.mubr.bf16.mxu0 0
        %595 = vmatmul.mubr.bf16.gmra.mrb[0].mxu0 %v378
        %v596 = vpop.f32.mrb[0].mxu0
        %v597 = vadd.f32 %v259, %v596
        %v598 = vpop.f32.mrb[0].mxu0
        %v599 = vpop.f32.mrb[0].mxu0
        %v600 = vadd.f32 %v259, %v599
        %v601 = vpop.f32.mrb[0].mxu0
        %602 = vmatprep.mubr.bf16.mxu0 0
        %603 = vmatmul.mubr.bf16.gmra.mrb[0].mxu0 %v381
        %v604 = vpop.f32.mrb[0].mxu0
        %v605 = vadd.f32 %v259, %v604
        %v606 = vpop.f32.mrb[0].mxu0
        %v607 = vpop.f32.mrb[0].mxu0
        %v608 = vadd.f32 %v259, %v607
        %v609 = vpop.f32.mrb[0].mxu0
        %610 = vmatprep.mubr.bf16.mxu0 0
        %611 = vmatmul.mubr.bf16.gmra.mrb[0].mxu0 %v384
        %v612 = vpop.f32.mrb[0].mxu0
        %v613 = vadd.f32 %v259, %v612
        %v614 = vpop.f32.mrb[0].mxu0
        %v615 = vpop.f32.mrb[0].mxu0
        %v616 = vadd.f32 %v259, %v615
        %v617 = vpop.f32.mrb[0].mxu0
        %618 = vmatprep.mubr.bf16.mxu0 0
        %619 = vmatmul.mubr.bf16.gmra.mrb[0].mxu0 %v387
        %v620 = vpop.f32.mrb[0].mxu0
        %v621 = vadd.f32 %v259, %v620
        %v622 = vpop.f32.mrb[0].mxu0
        %v623 = vpop.f32.mrb[0].mxu0
        %v624 = vadd.f32 %v259, %v623
        %v625 = vpop.f32.mrb[0].mxu0
        %626 = vmatprep.mubr.bf16.mxu0 0
        %627 = vmatmul.mubr.bf16.gmra.mrb[0].mxu0 %v390
        %v628 = vpop.f32.mrb[0].mxu0
        %v629 = vadd.f32 %v259, %v628
        %v630 = vpop.f32.mrb[0].mxu0
        %v631 = vpop.f32.mrb[0].mxu0
        %v632 = vadd.f32 %v259, %v631
        %v633 = vpop.f32.mrb[0].mxu0
        %634 = vmatprep.mubr.bf16.mxu0 0
        %635 = vmatmul.mubr.bf16.gmra.mrb[0].mxu0 %v393
        %v636 = vpop.f32.mrb[0].mxu0
        %v637 = vadd.f32 %v259, %v636
        %v638 = vpop.f32.mrb[0].mxu0
        %v639 = vpop.f32.mrb[0].mxu0
        %v640 = vadd.f32 %v259, %v639
        %v641 = vpop.f32.mrb[0].mxu0
        %642 = vmatprep.mubr.bf16.mxu0 0
        %643 = vmatmul.mubr.bf16.gmra.mrb[0].mxu0 %v396
        %v644 = vpop.f32.mrb[0].mxu0
        %v645 = vadd.f32 %v259, %v644
        %v646 = vpop.f32.mrb[0].mxu0
        %v647 = vpop.f32.mrb[0].mxu0
        %v648 = vadd.f32 %v259, %v647
        %v649 = vpop.f32.mrb[0].mxu0
        %650 = vmatprep.mubr.bf16.mxu0 0
        %651 = vmatmul.mubr.bf16.gmra.mrb[0].mxu0 %v399
        %v652 = vpop.f32.mrb[0].mxu0
        %v653 = vadd.f32 %v259, %v652
        %v654 = vpop.f32.mrb[0].mxu0
        %v655 = vpop.f32.mrb[0].mxu0
        %v656 = vadd.f32 %v259, %v655
        %v657 = vpop.f32.mrb[0].mxu0
        %658 = vmatprep.mubr.bf16.mxu0 0
        %659 = vmatmul.mubr.bf16.gmra.mrb[0].mxu0 %v402
        %v660 = vpop.f32.mrb[0].mxu0
        %v661 = vadd.f32 %v259, %v660
        %v662 = vpop.f32.mrb[0].mxu0
        %v663 = vpop.f32.mrb[0].mxu0
        %v664 = vadd.f32 %v259, %v663
        %v665 = vpop.f32.mrb[0].mxu0
        %666 = vmatprep.mubr.bf16.mxu0 0
        %667 = vmatmul.mubr.bf16.gmra.mrb[0].mxu0 %v405
        %v668 = vpop.f32.mrb[0].mxu0
        %v669 = vadd.f32 %v259, %v668
        %v670 = vpop.f32.mrb[0].mxu0
        %v671 = vpop.f32.mrb[0].mxu0
        %v672 = vadd.f32 %v259, %v671
        %v673 = vpop.f32.mrb[0].mxu0
        %674 = vmatprep.mubr.bf16.mxu0 0
        %675 = vmatmul.mubr.bf16.gmra.mrb[0].mxu0 %v408
        %v676 = vpop.f32.mrb[0].mxu0
        %v677 = vadd.f32 %v259, %v676
        %v678 = vpop.f32.mrb[0].mxu0
        %v679 = vpop.f32.mrb[0].mxu0
        %v680 = vadd.f32 %v259, %v679
        %v681 = vpop.f32.mrb[0].mxu0
        %682 = vmatprep.mubr.bf16.mxu0 0
        %683 = vmatmul.mubr.bf16.gmra.mrb[0].mxu0 %v411
        %v684 = vpop.f32.mrb[0].mxu0
        %v685 = vadd.f32 %v259, %v684
        %v686 = vpop.f32.mrb[0].mxu0
        %v687 = vpop.f32.mrb[0].mxu0
        %v688 = vadd.f32 %v259, %v687
        %v689 = vpop.f32.mrb[0].mxu0
        %690 = vmatprep.mubr.bf16.mxu0 0
        %691 = vmatmul.mubr.bf16.gmra.mrb[0].mxu0 %v414
        %v692 = vpop.f32.mrb[0].mxu0
        %v693 = vadd.f32 %v259, %v692
        %v694 = vpop.f32.mrb[0].mxu0
        %v695 = vpop.f32.mrb[0].mxu0
        %v696 = vadd.f32 %v259, %v695
        %v697 = vpop.f32.mrb[0].mxu0
        %698 = vmatprep.mubr.bf16.mxu0 0
        %699 = vmatmul.mubr.bf16.gmra.mrb[0].mxu0 %v417
        %v700 = vpop.f32.mrb[0].mxu0
        %v701 = vadd.f32 %v259, %v700
        %v702 = vpop.f32.mrb[0].mxu0
        %v703 = vpop.f32.mrb[0].mxu0
        %v704 = vadd.f32 %v259, %v703
        %v705 = vpop.f32.mrb[0].mxu0
        %706 = vmatprep.mubr.bf16.mxu0 0
        %707 = vmatmul.mubr.bf16.gmra.mrb[0].mxu0 %v420
        %v708 = vpop.f32.mrb[0].mxu0
        %v709 = vadd.f32 %v259, %v708
        %v710 = vpop.f32.mrb[0].mxu0
        %v711 = vpop.f32.mrb[0].mxu0
        %v712 = vadd.f32 %v259, %v711
        %v713 = vpop.f32.mrb[0].mxu0
        %714 = vdwg.mxu0
        %v715 = vmax.f32 %v461, 1e-06
        %v716 = vmax.f32 %v464, 1e-06
        %v717 = vmax.f32 %v469, 1e-06
        %v718 = vmax.f32 %v472, 1e-06
        %v719 = vmax.f32 %v477, 1e-06
        %v720 = vmax.f32 %v480, 1e-06
        %v721 = vmax.f32 %v485, 1e-06
        %v722 = vmax.f32 %v488, 1e-06
        %v723 = vmax.f32 %v493, 1e-06
        %v724 = vmax.f32 %v496, 1e-06
        %v725 = vmax.f32 %v501, 1e-06
        %v726 = vmax.f32 %v504, 1e-06
        %v727 = vmax.f32 %v509, 1e-06
        %v728 = vmax.f32 %v512, 1e-06
        %v729 = vmax.f32 %v517, 1e-06
        %v730 = vmax.f32 %v520, 1e-06
        %v731 = vmax.f32 %v525, 1e-06
        %v732 = vmax.f32 %v528, 1e-06
        %v733 = vmax.f32 %v533, 1e-06
        %v734 = vmax.f32 %v536, 1e-06
        %v735 = vmax.f32 %v541, 1e-06
        %v736 = vmax.f32 %v544, 1e-06
        %v737 = vmax.f32 %v549, 1e-06
        %v738 = vmax.f32 %v552, 1e-06
        %v739 = vmax.f32 %v557, 1e-06
        %v740 = vmax.f32 %v560, 1e-06
        %v741 = vmax.f32 %v565, 1e-06
        %v742 = vmax.f32 %v568, 1e-06
        %v743 = vmax.f32 %v573, 1e-06
        %v744 = vmax.f32 %v576, 1e-06
        %v745 = vmax.f32 %v581, 1e-06
        %v746 = vmax.f32 %v584, 1e-06
        %v747 = vmax.f32 %v589, 1e-06
        %v748 = vmax.f32 %v592, 1e-06
        %v749 = vmax.f32 %v597, 1e-06
        %v750 = vmax.f32 %v600, 1e-06
        %v751 = vmax.f32 %v605, 1e-06
        %v752 = vmax.f32 %v608, 1e-06
        %v753 = vmax.f32 %v613, 1e-06
        %v754 = vmax.f32 %v616, 1e-06
        %v755 = vmax.f32 %v621, 1e-06
        %v756 = vmax.f32 %v624, 1e-06
        %v757 = vmax.f32 %v629, 1e-06
        %v758 = vmax.f32 %v632, 1e-06
        %v759 = vmax.f32 %v637, 1e-06
        %v760 = vmax.f32 %v640, 1e-06
        %v761 = vmax.f32 %v645, 1e-06
        %v762 = vmax.f32 %v648, 1e-06
        %v763 = vmax.f32 %v653, 1e-06
        %v764 = vmax.f32 %v656, 1e-06
        %v765 = vmax.f32 %v661, 1e-06
        %v766 = vmax.f32 %v664, 1e-06
        %v767 = vmax.f32 %v669, 1e-06
        %v768 = vmax.f32 %v672, 1e-06
        %v769 = vmax.f32 %v677, 1e-06
        %v770 = vmax.f32 %v680, 1e-06
        %v771 = vmax.f32 %v685, 1e-06
        %v772 = vmax.f32 %v688, 1e-06
        %v773 = vmax.f32 %v693, 1e-06
        %v774 = vmax.f32 %v696, 1e-06
        %v775 = vmax.f32 %v701, 1e-06
        %v776 = vmax.f32 %v704, 1e-06
        %v777 = vmax.f32 %v709, 1e-06
        %v778 = vmax.f32 %v712, 1e-06
        %v779 = vlog2.pop %v715
        %v780 = vmul.f32 %v779, 0.6931472
        %v781 = vlog2.pop %v716
        %v782 = vmul.f32 %v781, 0.6931472
        %v783 = vlog2.pop %v717
        %v784 = vmul.f32 %v783, 0.6931472
        %v785 = vlog2.pop %v718
        %v786 = vmul.f32 %v785, 0.6931472
        %v787 = vlog2.pop %v719
        %v788 = vmul.f32 %v787, 0.6931472
        %v789 = vlog2.pop %v720
        %v790 = vmul.f32 %v789, 0.6931472
        %v791 = vlog2.pop %v721
        %v792 = vmul.f32 %v791, 0.6931472
        %v793 = vlog2.pop %v722
        %v794 = vmul.f32 %v793, 0.6931472
        %v795 = vlog2.pop %v723
        %v796 = vmul.f32 %v795, 0.6931472
        %v797 = vlog2.pop %v724
        %v798 = vmul.f32 %v797, 0.6931472
        %v799 = vlog2.pop %v725
        %v800 = vmul.f32 %v799, 0.6931472
        %v801 = vlog2.pop %v726
        %v802 = vmul.f32 %v801, 0.6931472
        %v803 = vlog2.pop %v727
        %v804 = vmul.f32 %v803, 0.6931472
        %v805 = vlog2.pop %v728
        %v806 = vmul.f32 %v805, 0.6931472
        %v807 = vlog2.pop %v729
        %v808 = vmul.f32 %v807, 0.6931472
        %v809 = vlog2.pop %v730
        %v810 = vmul.f32 %v809, 0.6931472
        %v811 = vlog2.pop %v731
        %v812 = vmul.f32 %v811, 0.6931472
        %v813 = vlog2.pop %v732
        %v814 = vmul.f32 %v813, 0.6931472
        %v815 = vlog2.pop %v733
        %v816 = vmul.f32 %v815, 0.6931472
        %v817 = vlog2.pop %v734
        %v818 = vmul.f32 %v817, 0.6931472
        %v819 = vlog2.pop %v735
        %v820 = vmul.f32 %v819, 0.6931472
        %v821 = vlog2.pop %v736
        %v822 = vmul.f32 %v821, 0.6931472
        %v823 = vlog2.pop %v737
        %v824 = vmul.f32 %v823, 0.6931472
        %v825 = vlog2.pop %v738
        %v826 = vmul.f32 %v825, 0.6931472
        %v827 = vlog2.pop %v739
        %v828 = vmul.f32 %v827, 0.6931472
        %v829 = vlog2.pop %v740
        %v830 = vmul.f32 %v829, 0.6931472
        %v831 = vlog2.pop %v741
        %v832 = vmul.f32 %v831, 0.6931472
        %v833 = vlog2.pop %v742
        %v834 = vmul.f32 %v833, 0.6931472
        %v835 = vlog2.pop %v743
        %v836 = vmul.f32 %v835, 0.6931472
        %v837 = vlog2.pop %v744
        %v838 = vmul.f32 %v837, 0.6931472
        %v839 = vlog2.pop %v745
        %v840 = vmul.f32 %v839, 0.6931472
        %v841 = vlog2.pop %v746
        %v842 = vmul.f32 %v841, 0.6931472
        %v843 = vlog2.pop %v747
        %v844 = vmul.f32 %v843, 0.6931472
        %v845 = vlog2.pop %v748
        %v846 = vmul.f32 %v845, 0.6931472
        %v847 = vlog2.pop %v749
        %v848 = vmul.f32 %v847, 0.6931472
        %v849 = vlog2.pop %v750
        %v850 = vmul.f32 %v849, 0.6931472
        %v851 = vlog2.pop %v751
        %v852 = vmul.f32 %v851, 0.6931472
        %v853 = vlog2.pop %v752
        %v854 = vmul.f32 %v853, 0.6931472
        %v855 = vlog2.pop %v753
        %v856 = vmul.f32 %v855, 0.6931472
        %v857 = vlog2.pop %v754
        %v858 = vmul.f32 %v857, 0.6931472
        %v859 = vlog2.pop %v755
        %v860 = vmul.f32 %v859, 0.6931472
        %v861 = vlog2.pop %v756
        %v862 = vmul.f32 %v861, 0.6931472
        %v863 = vlog2.pop %v757
        %v864 = vmul.f32 %v863, 0.6931472
        %v865 = vlog2.pop %v758
        %v866 = vmul.f32 %v865, 0.6931472
        %v867 = vlog2.pop %v759
        %v868 = vmul.f32 %v867, 0.6931472
        %v869 = vlog2.pop %v760
        %v870 = vmul.f32 %v869, 0.6931472
        %v871 = vlog2.pop %v761
        %v872 = vmul.f32 %v871, 0.6931472
        %v873 = vlog2.pop %v762
        %v874 = vmul.f32 %v873, 0.6931472
        %v875 = vlog2.pop %v763
        %v876 = vmul.f32 %v875, 0.6931472
        %v877 = vlog2.pop %v764
        %v878 = vmul.f32 %v877, 0.6931472
        %v879 = vlog2.pop %v765
        %v880 = vmul.f32 %v879, 0.6931472
        %v881 = vlog2.pop %v766
        %v882 = vmul.f32 %v881, 0.6931472
        %v883 = vlog2.pop %v767
        %v884 = vmul.f32 %v883, 0.6931472
        %v885 = vlog2.pop %v768
        %v886 = vmul.f32 %v885, 0.6931472
        %v887 = vlog2.pop %v769
        %v888 = vmul.f32 %v887, 0.6931472
        %v889 = vlog2.pop %v770
        %v890 = vmul.f32 %v889, 0.6931472
        %v891 = vlog2.pop %v771
        %v892 = vmul.f32 %v891, 0.6931472
        %v893 = vlog2.pop %v772
        %v894 = vmul.f32 %v893, 0.6931472
        %v895 = vlog2.pop %v773
        %v896 = vmul.f32 %v895, 0.6931472
        %v897 = vlog2.pop %v774
        %v898 = vmul.f32 %v897, 0.6931472
        %v899 = vlog2.pop %v775
        %v900 = vmul.f32 %v899, 0.6931472
        %v901 = vlog2.pop %v776
        %v902 = vmul.f32 %v901, 0.6931472
        %v903 = vlog2.pop %v777
        %v904 = vmul.f32 %v903, 0.6931472
        %v905 = vlog2.pop %v778
        %v906 = vmul.f32 %v905, 0.6931472
        %v907 = vstv %s234
        %v908 = vmul.f32 %v907, %v780
        %v909 = vmul.f32 %v907, %v782
        %v910 = vmul.f32 %v907, %v784
        %v911 = vmul.f32 %v907, %v786
        %v912 = vmul.f32 %v907, %v788
        %v913 = vmul.f32 %v907, %v790
        %v914 = vmul.f32 %v907, %v792
        %v915 = vmul.f32 %v907, %v794
        %v916 = vmul.f32 %v907, %v796
        %v917 = vmul.f32 %v907, %v798
        %v918 = vmul.f32 %v907, %v800
        %v919 = vmul.f32 %v907, %v802
        %v920 = vmul.f32 %v907, %v804
        %v921 = vmul.f32 %v907, %v806
        %v922 = vmul.f32 %v907, %v808
        %v923 = vmul.f32 %v907, %v810
        %v924 = vmul.f32 %v907, %v812
        %v925 = vmul.f32 %v907, %v814
        %v926 = vmul.f32 %v907, %v816
        %v927 = vmul.f32 %v907, %v818
        %v928 = vmul.f32 %v907, %v820
        %v929 = vmul.f32 %v907, %v822
        %v930 = vmul.f32 %v907, %v824
        %v931 = vmul.f32 %v907, %v826
        %v932 = vmul.f32 %v907, %v828
        %v933 = vmul.f32 %v907, %v830
        %v934 = vmul.f32 %v907, %v832
        %v935 = vmul.f32 %v907, %v834
        %v936 = vmul.f32 %v907, %v836
        %v937 = vmul.f32 %v907, %v838
        %v938 = vmul.f32 %v907, %v840
        %v939 = vmul.f32 %v907, %v842
        %v940 = vmul.f32 %v907, %v844
        %v941 = vmul.f32 %v907, %v846
        %v942 = vmul.f32 %v907, %v848
        %v943 = vmul.f32 %v907, %v850
        %v944 = vmul.f32 %v907, %v852
        %v945 = vmul.f32 %v907, %v854
        %v946 = vmul.f32 %v907, %v856
        %v947 = vmul.f32 %v907, %v858
        %v948 = vmul.f32 %v907, %v860
        %v949 = vmul.f32 %v907, %v862
        %v950 = vmul.f32 %v907, %v864
        %v951 = vmul.f32 %v907, %v866
        %v952 = vmul.f32 %v907, %v868
        %v953 = vmul.f32 %v907, %v870
        %v954 = vmul.f32 %v907, %v872
        %v955 = vmul.f32 %v907, %v874
        %v956 = vmul.f32 %v907, %v876
        %v957 = vmul.f32 %v907, %v878
        %v958 = vmul.f32 %v907, %v880
        %v959 = vmul.f32 %v907, %v882
        %v960 = vmul.f32 %v907, %v884
        %v961 = vmul.f32 %v907, %v886
        %v962 = vmul.f32 %v907, %v888
        %v963 = vmul.f32 %v907, %v890
        %v964 = vmul.f32 %v907, %v892
        %v965 = vmul.f32 %v907, %v894
        %v966 = vmul.f32 %v907, %v896
        %v967 = vmul.f32 %v907, %v898
        %v968 = vmul.f32 %v907, %v900
        %v969 = vmul.f32 %v907, %v902
        %v970 = vmul.f32 %v907, %v904
        %v971 = vmul.f32 %v907, %v906
        %v972 = vmul.f32 %v908, 1.442695
        %v973 = vpow.pop %v972
        %v974 = vmul.f32 %v909, 1.442695
        %v975 = vpow.pop %v974
        %v976 = vmul.f32 %v910, 1.442695
        %v977 = vpow.pop %v976
        %v978 = vmul.f32 %v911, 1.442695
        %v979 = vpow.pop %v978
        %v980 = vmul.f32 %v912, 1.442695
        %v981 = vpow.pop %v980
        %v982 = vmul.f32 %v913, 1.442695
        %v983 = vpow.pop %v982
        %v984 = vmul.f32 %v914, 1.442695
        %v985 = vpow.pop %v984
        %v986 = vmul.f32 %v915, 1.442695
        %v987 = vpow.pop %v986
        %v988 = vmul.f32 %v916, 1.442695
        %v989 = vpow.pop %v988
        %v990 = vmul.f32 %v917, 1.442695
        %v991 = vpow.pop %v990
        %v992 = vmul.f32 %v918, 1.442695
        %v993 = vpow.pop %v992
        %v994 = vmul.f32 %v919, 1.442695
        %v995 = vpow.pop %v994
        %v996 = vmul.f32 %v920, 1.442695
        %v997 = vpow.pop %v996
        %v998 = vmul.f32 %v921, 1.442695
        %v999 = vpow.pop %v998
        %v1000 = vmul.f32 %v922, 1.442695
        %v1001 = vpow.pop %v1000
        %v1002 = vmul.f32 %v923, 1.442695
        %v1003 = vpow.pop %v1002
        %v1004 = vmul.f32 %v924, 1.442695
        %v1005 = vpow.pop %v1004
        %v1006 = vmul.f32 %v925, 1.442695
        %v1007 = vpow.pop %v1006
        %v1008 = vmul.f32 %v926, 1.442695
        %v1009 = vpow.pop %v1008
        %v1010 = vmul.f32 %v927, 1.442695
        %v1011 = vpow.pop %v1010
        %v1012 = vmul.f32 %v928, 1.442695
        %v1013 = vpow.pop %v1012
        %v1014 = vmul.f32 %v929, 1.442695
        %v1015 = vpow.pop %v1014
        %v1016 = vmul.f32 %v930, 1.442695
        %v1017 = vpow.pop %v1016
        %v1018 = vmul.f32 %v931, 1.442695
        %v1019 = vpow.pop %v1018
        %v1020 = vmul.f32 %v932, 1.442695
        %v1021 = vpow.pop %v1020
        %v1022 = vmul.f32 %v933, 1.442695
        %v1023 = vpow.pop %v1022
        %v1024 = vmul.f32 %v934, 1.442695
        %v1025 = vpow.pop %v1024
        %v1026 = vmul.f32 %v935, 1.442695
        %v1027 = vpow.pop %v1026
        %v1028 = vmul.f32 %v936, 1.442695
        %v1029 = vpow.pop %v1028
        %v1030 = vmul.f32 %v937, 1.442695
        %v1031 = vpow.pop %v1030
        %v1032 = vmul.f32 %v938, 1.442695
        %v1033 = vpow.pop %v1032
        %v1034 = vmul.f32 %v939, 1.442695
        %v1035 = vpow.pop %v1034
        %v1036 = vmul.f32 %v940, 1.442695
        %v1037 = vpow.pop %v1036
        %v1038 = vmul.f32 %v941, 1.442695
        %v1039 = vpow.pop %v1038
        %v1040 = vmul.f32 %v942, 1.442695
        %v1041 = vpow.pop %v1040
        %v1042 = vmul.f32 %v943, 1.442695
        %v1043 = vpow.pop %v1042
        %v1044 = vmul.f32 %v944, 1.442695
        %v1045 = vpow.pop %v1044
        %v1046 = vmul.f32 %v945, 1.442695
        %v1047 = vpow.pop %v1046
        %v1048 = vmul.f32 %v946, 1.442695
        %v1049 = vpow.pop %v1048
        %v1050 = vmul.f32 %v947, 1.442695
        %v1051 = vpow.pop %v1050
        %v1052 = vmul.f32 %v948, 1.442695
        %v1053 = vpow.pop %v1052
        %v1054 = vmul.f32 %v949, 1.442695
        %v1055 = vpow.pop %v1054
        %v1056 = vmul.f32 %v950, 1.442695
        %v1057 = vpow.pop %v1056
        %v1058 = vmul.f32 %v951, 1.442695
        %v1059 = vpow.pop %v1058
        %v1060 = vmul.f32 %v952, 1.442695
        %v1061 = vpow.pop %v1060
        %v1062 = vmul.f32 %v953, 1.442695
        %v1063 = vpow.pop %v1062
        %v1064 = vmul.f32 %v954, 1.442695
        %v1065 = vpow.pop %v1064
        %v1066 = vmul.f32 %v955, 1.442695
        %v1067 = vpow.pop %v1066
        %v1068 = vmul.f32 %v956, 1.442695
        %v1069 = vpow.pop %v1068
        %v1070 = vmul.f32 %v957, 1.442695
        %v1071 = vpow.pop %v1070
        %v1072 = vmul.f32 %v958, 1.442695
        %v1073 = vpow.pop %v1072
        %v1074 = vmul.f32 %v959, 1.442695
        %v1075 = vpow.pop %v1074
        %v1076 = vmul.f32 %v960, 1.442695
        %v1077 = vpow.pop %v1076
        %v1078 = vmul.f32 %v961, 1.442695
        %v1079 = vpow.pop %v1078
        %v1080 = vmul.f32 %v962, 1.442695
        %v1081 = vpow.pop %v1080
        %v1082 = vmul.f32 %v963, 1.442695
        %v1083 = vpow.pop %v1082
        %v1084 = vmul.f32 %v964, 1.442695
        %v1085 = vpow.pop %v1084
        %v1086 = vmul.f32 %v965, 1.442695
        %v1087 = vpow.pop %v1086
        %v1088 = vmul.f32 %v966, 1.442695
        %v1089 = vpow.pop %v1088
        %v1090 = vmul.f32 %v967, 1.442695
        %v1091 = vpow.pop %v1090
        %v1092 = vmul.f32 %v968, 1.442695
        %v1093 = vpow.pop %v1092
        %v1094 = vmul.f32 %v969, 1.442695
        %v1095 = vpow.pop %v1094
        %v1096 = vmul.f32 %v970, 1.442695
        %v1097 = vpow.pop %v1096
        %v1098 = vmul.f32 %v971, 1.442695
        %v1099 = vpow.pop %v1098
        %v1100 = vld [vmem:[#allocation2] sm:$0x1]
        %v1101 = vadd.f32 %v973, %v975
        %v1102 = vadd.f32 %v1101, %v977
        %v1103 = vadd.f32 %v1102, %v979
        %v1104 = vadd.f32 %v1103, %v981
        %v1105 = vadd.f32 %v1104, %v983
        %v1106 = vadd.f32 %v1105, %v985
        %v1107 = vadd.f32 %v1106, %v987
        %v1108 = vadd.f32 %v1107, %v989
        %v1109 = vadd.f32 %v1108, %v991
        %v1110 = vadd.f32 %v1109, %v993
        %v1111 = vadd.f32 %v1110, %v995
        %v1112 = vadd.f32 %v1111, %v997
        %v1113 = vadd.f32 %v1112, %v999
        %v1114 = vadd.f32 %v1113, %v1001
        %v1115 = vadd.f32 %v1114, %v1003
        %v1116 = vadd.f32 %v1115, %v1005
        %v1117 = vadd.f32 %v1116, %v1007
        %v1118 = vadd.f32 %v1117, %v1009
        %v1119 = vadd.f32 %v1118, %v1011
        %v1120 = vadd.f32 %v1119, %v1013
        %v1121 = vadd.f32 %v1120, %v1015
        %v1122 = vadd.f32 %v1121, %v1017
        %v1123 = vadd.f32 %v1122, %v1019
        %v1124 = vadd.f32 %v1123, %v1021
        %v1125 = vadd.f32 %v1124, %v1023
        %v1126 = vadd.f32 %v1125, %v1025
        %v1127 = vadd.f32 %v1126, %v1027
        %v1128 = vadd.f32 %v1127, %v1029
        %v1129 = vadd.f32 %v1128, %v1031
        %v1130 = vadd.f32 %v1129, %v1033
        %v1131 = vadd.f32 %v1130, %v1035
        %v1132 = vadd.f32 %v1131, %v1037
        %v1133 = vadd.f32 %v1132, %v1039
        %v1134 = vadd.f32 %v1133, %v1041
        %v1135 = vadd.f32 %v1134, %v1043
        %v1136 = vadd.f32 %v1135, %v1045
        %v1137 = vadd.f32 %v1136, %v1047
        %v1138 = vadd.f32 %v1137, %v1049
        %v1139 = vadd.f32 %v1138, %v1051
        %v1140 = vadd.f32 %v1139, %v1053
        %v1141 = vadd.f32 %v1140, %v1055
        %v1142 = vadd.f32 %v1141, %v1057
        %v1143 = vadd.f32 %v1142, %v1059
        %v1144 = vadd.f32 %v1143, %v1061
        %v1145 = vadd.f32 %v1144, %v1063
        %v1146 = vadd.f32 %v1145, %v1065
        %v1147 = vadd.f32 %v1146, %v1067
        %v1148 = vadd.f32 %v1147, %v1069
        %v1149 = vadd.f32 %v1148, %v1071
        %v1150 = vadd.f32 %v1149, %v1073
        %v1151 = vadd.f32 %v1150, %v1075
        %v1152 = vadd.f32 %v1151, %v1077
        %v1153 = vadd.f32 %v1152, %v1079
        %v1154 = vadd.f32 %v1153, %v1081
        %v1155 = vadd.f32 %v1154, %v1083
        %v1156 = vadd.f32 %v1155, %v1085
        %v1157 = vadd.f32 %v1156, %v1087
        %v1158 = vadd.f32 %v1157, %v1089
        %v1159 = vadd.f32 %v1158, %v1091
        %v1160 = vadd.f32 %v1159, %v1093
        %v1161 = vadd.f32 %v1160, %v1095
        %v1162 = vadd.f32 %v1161, %v1097
        %v1163 = vadd.f32 %v1162, %v1099
        %v1164 = vrot.slane %v1163, 4
        %v1165 = vadd.f32 %v1163, %v1164
        %v1166 = vrot.slane %v1165, 2
        %v1167 = vadd.f32 %v1165, %v1166
        %v1168 = vrot.slane %v1167, 1
        %v1169 = vadd.f32 %v1167, %v1168
        %v1170 = vadd.f32 %v1100, %v1169
        %1171 = vst [vmem:[#allocation2] sm:$0x1] %v1170
        %p1172 = scmp.eq.s32.totalorder %s28, 1
        // Predicated region
        $region45: #{tpu_custom_call.1} parent=35 // pred_check
          %p1173 = pneg %p1172
        $region46: #{tpu_custom_call.1} parent=35 // pred_check_branch
          %1175 = sbr.rel (%p1173) target = $region48
        $region47: #{tpu_custom_call.1} parent=35 // pred_region
          %v1176 = vld [vmem:[#allocation2] sm:$0x1]
          %v1177 = vrcp.pop 1024.0
          %v1178 = vmul.f32 %v1176, %v1177
          %v1179 = vlog2.pop %v1178
          %v1180 = vmul.f32 %v1179, 0.6931472
          %v1181 = vrcp.pop %v907
          %v1182 = vmul.f32 %v1180, %v1181
          %v1183 = vmul.f32 %v1182, 1.442695
          %v1184 = vpow.pop %v1183
          %1185 = vst [vmem:[%s230] sm:$0x1] %v1184
        $region48: #{tpu_custom_call.1} parent=35 // pred_fallthru
          _
        %s1186 = sand.u32 %s134, 1
        %s1187 = scalar_lea.sflag [#allocation6], %s1186
        %s1188 = sand.u32 %s134, 1
        %s1189 = scalar_lea.vmem [#allocation7], %s1188
        // Predicated region
        $region49: #{tpu_custom_call.1} parent=35 // pred_check
          %p1190 = pneg %p144
        $region50: #{tpu_custom_call.1} parent=35 // pred_check_branch
          %1192 = sbr.rel (%p1190) target = $region52
        $region51: #{tpu_custom_call.1} parent=35 // pred_region
          %s1194 = ssub.s32 16, 16
          %1195 = vsyncadd %s1187, %s1194
          %s1196 = smul.addr %s27, 16
          %s1197 = scalar_lea.hbm %s4, %s1196
          %s1199 = sshll.u32 %s1189, 4
          %s1200 = int_to_ptr.vmem [resolvable:$true] %s1199
          %1202 = dma.vmem_to_hbm [thread:$0]  %s1200, 16, %s1197, %s1187
        $region52: #{tpu_custom_call.1} parent=35 // pred_fallthru
          _
      $region36: #{tpu_custom_call.1} parent=5 // pred_fallthru
        _
      %p1203 = scmp.le.s32.totalorder 2, %s18
      // Predicated region
      $region53: #{tpu_custom_call.1} parent=5 // pred_check
        %p1204 = pneg %p1203
      $region54: #{tpu_custom_call.1} parent=5 // pred_check_branch
        %1206 = sbr.rel (%p1204) target = $region56
      $region55: #{tpu_custom_call.1} parent=5 // pred_region
        %s1207 = ssub.s32 %s18, 2
        // Predicated region
        $region57: #{tpu_custom_call.1} parent=55 // pred_check
          %p1208 = pneg %p150
        $region58: #{tpu_custom_call.1} parent=55 // pred_check_branch
          %1210 = sbr.rel (%p1208) target = $region60
        $region59: #{tpu_custom_call.1} parent=55 // pred_region
          %s1211 = sand.u32 %s135, 1
          %s1212 = scalar_lea.sflag [#allocation6], %s1211
          %s1213 = sand.u32 %s135, 1
          %s1214 = scalar_lea.vmem [#allocation7], %s1213
          %1215 = dma.done %s1212, 16
        $region60: #{tpu_custom_call.1} parent=55 // pred_fallthru
          _
      $region56: #{tpu_custom_call.1} parent=5 // pred_fallthru
        _
    $region6: #{tpu_custom_call.1} parent=1 // loop_footer
      %s22 = sadd.s32 1, %s18
    $region7: #{tpu_custom_call.1} parent=1 // loop_footer_branch
      %17 = sbr.rel target = $region3
    $region8: #{tpu_custom_call.1} parent=1 // loop_exit
      _
    %1216 = vsyncpa [#allocation5], 1
    %s1217 = scalar_lea.sflag [#allocation5], 1
    %1218 = vsyncpa %s1217, 1
    %1219 = vsyncpa [#allocation6], 1
    %s1220 = scalar_lea.sflag [#allocation6], 1
    %1221 = vsyncpa %s1220, 1

</llo_original>
